<compile_context>
chip_gen: v6e
topology: v6e:2x2x1
jax: 0.10.0
libtpu: 0.0.40
codegen_flags: <defaults>
</compile_context>

<pallas_src>
import math
from functools import partial

import jax
import jax.numpy as jnp
from jax.experimental import pallas as pl
from jax.experimental.pallas import tpu as pltpu

LANES = 128


def _cdiv(a, b):
    return (a + b - 1) // b


def _round_up(n, m):
    return _cdiv(n, m) * m


def pcnn_kernel(x_ref, emb_ref, w_ref, b_ref, o_ref):
    # x_ref  : (TB*L, K*C)  compute dtype -- im2col'd inputs for TB examples
    # emb_ref: (TB*L, Fp)   compute dtype -- mask embedding, interleaved + padded
    # w_ref  : (K*C, Fp)    compute dtype -- conv weight, interleaved + padded
    # b_ref  : (1, Fp)      f32           -- conv bias, interleaved + padded
    # o_ref  : (TB, Fp)     f32           -- torch .view(-1, 3*F) order (+ pad lanes)
    TB, Fp = o_ref.shape
    L = x_ref.shape[0] // TB
    # Single fused conv matmul for all TB examples / K taps / 3 pieces (MXU).
    conv = jnp.dot(x_ref[...], w_ref[...], preferred_element_type=jnp.float32)
    conv = conv + b_ref[...]                                 # (TB*L, Fp) f32
    # Piece-wise masking is one lane-dense VPU multiply (emb already interleaved).
    prod = conv * emb_ref[...].astype(jnp.float32)           # (TB*L, Fp) f32
    # Piece-wise max pooling: sublane max over L (L=8 -> one sublane group / vreg).
    o_ref[...] = jnp.max(prod.reshape(TB, L, Fp), axis=1)    # (TB, Fp) f32


@partial(jax.jit, static_argnames=("compute_dtype", "rows_target"))
def piecewise_cnn_forward(x, x_mask, w_torch, b, table, *,
                          compute_dtype=jnp.bfloat16, rows_target=8192):
    """x: (B, L, C) f32, x_mask: (B, L) int in [0, 4),
    w_torch: (F, C, K) Conv1d weight, b: (F,), table: (4, 3) mask embedding.
    Returns (B, 3 * F) float32 in the PyTorch module's flatten order (h*3 + p)."""
    B, L, C = x.shape
    F, _, K = w_torch.shape
    KC = K * C
    F3 = 3 * F
    Fp = _round_up(F3, LANES)                 # lane-dense (unmasked-vst) output

    # ---- tiling: large blocks (~rows_target im2col rows / step), even grid ----
    TB_want = _round_up(max(8, rows_target // L), 8)
    B8 = _round_up(B, 8)
    if B8 <= TB_want:
        TB, B_pad = B8, B8                    # small batch: single step
    else:
        n_steps = max(2, _cdiv(B8, TB_want))
        n_steps += n_steps % 2                # even grid -> both v7x TCs busy
        TB = _round_up(_cdiv(B8, n_steps), 8)
        B_pad = TB * n_steps
    grid = (B_pad // TB,)

    # ---- wrapper-side prep (cheap XLA ops; layout plumbing stays out of kernel)
    # Conv1d(padding=1) as im2col: x_col[b*L + t, k*C + c] = x_padded[b, t+k, c].
    xp = jnp.pad(x, ((0, B_pad - B), (1, 1), (0, 0)))
    x_col = jnp.concatenate([xp[:, k:k + L, :] for k in range(K)], axis=-1)
    x_col = x_col.reshape(B_pad * L, KC).astype(compute_dtype)

    # Conv weight (F, C, K) -> (K*C, F) -> interleave columns to 3h+p, pad to Fp.
    w2 = jnp.transpose(w_torch, (2, 1, 0)).reshape(KC, F)
    w_int = jnp.pad(jnp.repeat(w2, 3, axis=1), ((0, 0), (0, Fp - F3)))
    w_int = w_int.astype(compute_dtype)
    b_int = jnp.pad(jnp.repeat(b, 3), (0, Fp - F3)).reshape(1, Fp)
    b_int = b_int.astype(jnp.float32)

    # 4-entry mask-embedding gather + interleave: emb_int[b*L+l, 3h+p] = table[m, p].
    mask_p = jnp.pad(x_mask.astype(jnp.int32), ((0, B_pad - B), (0, 0)))
    emb = table.astype(jnp.float32)[mask_p]                       # (B_pad, L, 3)
    emb_int = jnp.pad(jnp.tile(emb, (1, 1, F)), ((0, 0), (0, 0), (0, Fp - F3)))
    emb_int = emb_int.reshape(B_pad * L, Fp).astype(compute_dtype)

    itemsize = jnp.dtype(compute_dtype).itemsize
    cost = pl.CostEstimate(
        flops=2 * B_pad * L * KC * Fp + 2 * B_pad * L * Fp,
        transcendentals=0,
        bytes_accessed=(B_pad * L * KC + B_pad * L * Fp + KC * Fp) * itemsize
                       + (Fp + B_pad * Fp) * 4)

    out = pl.pallas_call(
        pcnn_kernel,
        out_shape=jax.ShapeDtypeStruct((B_pad, Fp), jnp.float32),
        grid_spec=pltpu.PrefetchScalarGridSpec(
            num_scalar_prefetch=0,
            grid=grid,
            in_specs=[
                pl.BlockSpec((TB * L, KC), lambda i: (i, 0)),   # im2col X
                pl.BlockSpec((TB * L, Fp), lambda i: (i, 0)),   # interleaved emb
                pl.BlockSpec((KC, Fp), lambda i: (0, 0)),       # interleaved W
                pl.BlockSpec((1, Fp), lambda i: (0, 0)),        # interleaved bias
            ],
            out_specs=pl.BlockSpec((TB, Fp), lambda i: (i, 0)),
        ),
        compiler_params=pltpu.CompilerParams(
            dimension_semantics=("parallel",),
            vmem_limit_bytes=32 << 20),
        cost_estimate=cost,
    )(x_col, emb_int, w_int, b_int)

    # Pad rows (B..B_pad) and pad lanes (3F..Fp) are zeros; slice them off here.
    return out[:B, :F3]


def ref_forward(x, x_mask, w_torch, b, table, compute_dtype=jnp.float32):
    """Pure-JAX reference of the PyTorch forward.  Conv/mask operands are
    quantized to `compute_dtype` (then upcast) to match the kernel's MXU
    operand dtype; all accumulation / pooling is f32 in both."""
    B, L, C = x.shape
    F, _, K = w_torch.shape
    xq = x.astype(compute_dtype).astype(jnp.float32)
    wq = jnp.transpose(w_torch, (2, 1, 0)).astype(compute_dtype).astype(jnp.float32)
    tq = table.astype(compute_dtype).astype(jnp.float32)
    xp = jnp.pad(xq, ((0, 0), (1, 1), (0, 0)))
    conv = jnp.broadcast_to(b[None, None, :].astype(jnp.float32), (B, L, F))
    for k in range(K):
        conv = conv + jnp.einsum("blc,cf->blf", xp[:, k:k + L, :], wq[k],
                                 precision=jax.lax.Precision.HIGHEST)
    emb = tq[x_mask.astype(jnp.int32)]                          # (B, L, 3)
    prod = emb[:, :, None, :] * conv[:, :, :, None]             # (B, L, F, 3)
    pooled = jnp.max(prod, axis=1)                              # (B, F, 3)
    return pooled.reshape(B, F * 3)                             # column = h*3 + p


def xavier_uniform(key, shape, fan_in, fan_out):
    bound = math.sqrt(6.0 / (fan_in + fan_out))
    return jax.random.uniform(key, shape, jnp.float32, -bound, bound)


if __name__ == "__main__":
    # Shapes consistent with the module: input_size=32, filter_size=3,
    # num_filters=32, seq_len=8.  Batch 64 is small but exercises the grid.
    B, L, C, F, K = 64, 8, 32, 32, 3
    key = jax.random.PRNGKey(0)
    k1, k2, k3, k4, k5 = jax.random.split(key, 5)

    x = jax.random.normal(k1, (B, L, C), jnp.float32)
    x_mask = jax.random.randint(k2, (B, L), 0, 4, jnp.int32)
    # Conv1d weight (torch shape (F, C, K)) ~ xavier_uniform_, bias = zeros.
    w_torch = xavier_uniform(k3, (F, C, K), fan_in=C * K, fan_out=F * K)
    b = jnp.zeros((F,), jnp.float32)
    # _init_weight() overwrites the pretrained one-hot table with xavier_uniform_.
    table = xavier_uniform(k4, (4, 3), fan_in=3, fan_out=4)

    ref_f32 = ref_forward(x, x_mask, w_torch, b, table, jnp.float32)

    # f32 MXU operands.  Loose tolerance: the in-kernel f32 matmul precision vs
    # the HIGHEST-precision XLA reference may differ at the ~1e-3 level.
    out_f32 = piecewise_cnn_forward(x, x_mask, w_torch, b, table,
                                    compute_dtype=jnp.float32)
    jax.block_until_ready(out_f32)
    assert out_f32.shape == (B, 3 * F), out_f32.shape
    assert jnp.allclose(out_f32, ref_f32, atol=2e-2, rtol=2e-2), \
        float(jnp.max(jnp.abs(out_f32 - ref_f32)))

    # bf16 operands (default path, all generations), f32 accumulation.  The
    # reference quantizes operands identically, so this is the tight check.
    out_bf16 = piecewise_cnn_forward(x, x_mask, w_torch, b, table)
    jax.block_until_ready(out_bf16)
    ref_bf16 = ref_forward(x, x_mask, w_torch, b, table, jnp.bfloat16)
    assert jnp.allclose(out_bf16, ref_bf16, atol=1e-3, rtol=1e-3), \
        float(jnp.max(jnp.abs(out_bf16 - ref_bf16)))

    # Multi-step (even-length) grid + nonzero-bias wiring: small rows_target
    # forces TB=32 -> grid=(2,) at this batch size.
    b_nz = xavier_uniform(k5, (F,), fan_in=C * K, fan_out=F)
    ref_nz = ref_forward(x, x_mask, w_torch, b_nz, table, jnp.bfloat16)
    out_nz = piecewise_cnn_forward(x, x_mask, w_torch, b_nz, table,
                                   rows_target=256)
    jax.block_until_ready(out_nz)
    assert jnp.allclose(out_nz, ref_nz, atol=1e-3, rtol=1e-3), \
        float(jnp.max(jnp.abs(out_nz - ref_nz)))

    # Small ragged batch (B=2 < 8) exercises the batch-padding + row-slice path.
    out_small = piecewise_cnn_forward(x[:2], x_mask[:2], w_torch, b, table,
                                      compute_dtype=jnp.float32)
    jax.block_until_ready(out_small)
    assert jnp.allclose(out_small, ref_f32[:2], atol=2e-2, rtol=2e-2), \
        float(jnp.max(jnp.abs(out_small - ref_f32[:2])))

    print("KERNEL_OK")
</pallas_src>

<mosaic_0001>
module attributes {stable_mosaic.version = 11 : i64} {
  func.func @pcnn_kernel(%arg0: i32, %arg1: memref<512x96xf32, #tpu.memory_space<vmem>>, %arg2: memref<512x128xf32, #tpu.memory_space<vmem>>, %arg3: memref<96x128xf32, #tpu.memory_space<vmem>>, %arg4: memref<1x128xf32, #tpu.memory_space<vmem>>, %arg5: memref<64x128xf32, #tpu.memory_space<vmem>>) attributes {dimension_semantics = [#tpu.dimension_semantics<parallel>], iteration_bounds = array<i64: 1>, scalar_prefetch = 0 : i64, scratch_operands = 0 : i64, tpu.core_type = #tpu.core_type<tc>, window_params = [{transform_indices = @transform_0, window_bounds = array<i64: 512, 96>}, {transform_indices = @transform_1, window_bounds = array<i64: 512, 128>}, {pipeline_mode = #tpu.pipeline_mode<synchronous>, transform_indices = @transform_2, window_bounds = array<i64: 96, 128>}, {pipeline_mode = #tpu.pipeline_mode<synchronous>, transform_indices = @transform_3, window_bounds = array<i64: 1, 128>}, {transform_indices = @transform_4, window_bounds = array<i64: 64, 128>}]} {
    %c0 = arith.constant 0 : index
    %c0_0 = arith.constant 0 : index
    %0 = vector.load %arg1[%c0, %c0_0] : memref<512x96xf32, #tpu.memory_space<vmem>>, vector<512x96xf32>
    %c0_1 = arith.constant 0 : index
    %c0_2 = arith.constant 0 : index
    %1 = vector.load %arg3[%c0_1, %c0_2] : memref<96x128xf32, #tpu.memory_space<vmem>>, vector<96x128xf32>
    %cst = arith.constant dense<0.000000e+00> : vector<512x128xf32>
    %2 = tpu.matmul %0, %1, %cst {dimension_numbers = #tpu.dot_dimension_numbers<[1], [0], [0], [1], [0, 0, 1, 1], [], []>} : vector<512x96xf32>, vector<96x128xf32>, vector<512x128xf32> -> vector<512x128xf32>
    %c0_3 = arith.constant 0 : index
    %c0_4 = arith.constant 0 : index
    %3 = vector.load %arg4[%c0_3, %c0_4] : memref<1x128xf32, #tpu.memory_space<vmem>>, vector<1x128xf32>
    %4 = vector.broadcast %3 : vector<1x128xf32> to vector<512x128xf32>
    %5 = arith.addf %2, %4 : vector<512x128xf32>
    %c0_5 = arith.constant 0 : index
    %c0_6 = arith.constant 0 : index
    %6 = vector.load %arg2[%c0_5, %c0_6] : memref<512x128xf32, #tpu.memory_space<vmem>>, vector<512x128xf32>
    %7 = arith.mulf %5, %6 : vector<512x128xf32>
    %8 = vector.shape_cast %7 : vector<512x128xf32> to vector<64x8x128xf32>
    %cst_7 = arith.constant dense<0xFF800000> : vector<64x128xf32>
    %9 = vector.multi_reduction <maximumf>, %8, %cst_7 [1] : vector<64x8x128xf32> to vector<64x128xf32>
    %c0_8 = arith.constant 0 : index
    %c0_9 = arith.constant 0 : index
    %10 = vector.load %arg5[%c0_8, %c0_9] : memref<64x128xf32, #tpu.memory_space<vmem>>, vector<64x128xf32>
    tpu.vector_store %arg5[%c0_8, %c0_9], %9 {strides = array<i32>} : memref<64x128xf32, #tpu.memory_space<vmem>>, vector<64x128xf32>,
    return
  }
  func.func @transform_0(%arg0: i32) -> (i32, i32) {
    %c0_i32 = arith.constant 0 : i32
    %c0_i32_0 = arith.constant 0 : i32
    return %arg0, %c0_i32 : i32, i32
  }
  func.func @transform_1(%arg0: i32) -> (i32, i32) {
    %c0_i32 = arith.constant 0 : i32
    %c0_i32_0 = arith.constant 0 : i32
    return %arg0, %c0_i32 : i32, i32
  }
  func.func @transform_2(%arg0: i32) -> (i32, i32) {
    %c0_i32 = arith.constant 0 : i32
    %c0_i32_0 = arith.constant 0 : i32
    %c0_i32_1 = arith.constant 0 : i32
    return %c0_i32, %c0_i32_0 : i32, i32
  }
  func.func @transform_3(%arg0: i32) -> (i32, i32) {
    %c0_i32 = arith.constant 0 : i32
    %c0_i32_0 = arith.constant 0 : i32
    %c0_i32_1 = arith.constant 0 : i32
    return %c0_i32, %c0_i32_0 : i32, i32
  }
  func.func @transform_4(%arg0: i32) -> (i32, i32) {
    %c0_i32 = arith.constant 0 : i32
    %c0_i32_0 = arith.constant 0 : i32
    return %arg0, %c0_i32 : i32, i32
  }
}

</mosaic_0001>

<llo_original>
// kernel: piecewise_cnn_forward.1
$region0: #{piecewise_cnn_forward.1}
  #allocation0 [shape = 'u32[]', space=smem, size = 0x4, offset = 0x4, fixed_abs, tag = 'smem constant byte address 0x4 - core index']
  #allocation1 [shape = 'u32[144,128]{1,0:T(1,128)}', space=vmem, size = 0x12000, scoped, tag = 'internal scratch']
  %s0 = inlined_call_operand.vmem [shape: f32[512,96], index: 0, kind: input, shape index: {}]
  %s1 = inlined_call_operand.vmem [shape: f32[512,128], index: 1, kind: input, shape index: {}]
  %s2 = inlined_call_operand.vmem [shape: f32[96,128], index: 2, kind: input, shape index: {}]
  %s3 = inlined_call_operand.vmem [shape: f32[1,128], index: 3, kind: input, shape index: {}]
  %s4 = inlined_call_operand.hbm [shape: f32[64,128], index: 4, kind: output, shape index: {}]
  %s5 = sld [smem:[#allocation0]]
  $region26: #{piecewise_cnn_forward.1} parent=0
    _
  %s7 = ssub.s32 1, %s5
  %s8 = scalar_select 0, %s7, %s5
  $region1: #{piecewise_cnn_forward.1} parent=0
    #allocation2 [shape = 'u8[32768]{0}', space=vmem, size = 0x8000, scoped, tag = 'output window, operand 0, single buffered']
    #allocation3 [shape = 's32[1]{0}', space=sflag, size = 0x4, scoped, tag = 'scoped memory for piecewise_cnn_forward.1']
    %9 = vsyncpa [#allocation3], 0
    // Predicated region
    $region2: #{piecewise_cnn_forward.1} parent=1 // pred_check
      _
    $region3: #{piecewise_cnn_forward.1} parent=1 // pred_check_branch
      %11 = sbr.rel (0) target = $region5
    $region4: #{piecewise_cnn_forward.1} parent=1 // pred_region
      _
    $region5: #{piecewise_cnn_forward.1} parent=1 // pred_fallthru
      _
    // Predicated region
    $region6: #{piecewise_cnn_forward.1} parent=1 // pred_check
      _
    $region7: #{piecewise_cnn_forward.1} parent=1 // pred_check_branch
      %13 = sbr.rel (0) target = $region9
    $region8: #{piecewise_cnn_forward.1} parent=1 // pred_region
      _
    $region9: #{piecewise_cnn_forward.1} parent=1 // pred_fallthru
      _
    // Predicated region
    $region10: #{piecewise_cnn_forward.1} parent=1 // pred_check
      _
    $region11: #{piecewise_cnn_forward.1} parent=1 // pred_check_branch
      %15 = sbr.rel (0) target = $region13
    $region12: #{piecewise_cnn_forward.1} parent=1 // pred_region
      _
    $region13: #{piecewise_cnn_forward.1} parent=1 // pred_fallthru
      _
    // Predicated region
    $region14: #{piecewise_cnn_forward.1} parent=1 // pred_check
      _
    $region15: #{piecewise_cnn_forward.1} parent=1 // pred_check_branch
      %17 = sbr.rel (0) target = $region17
    $region16: #{piecewise_cnn_forward.1} parent=1 // pred_region
      _
    $region17: #{piecewise_cnn_forward.1} parent=1 // pred_fallthru
      _
    %v18 = vld [vmem:[%s0] sm:$0xff]
    %v19 = vld [vmem:[%s0 + $0x8] sm:$0xff]
    %v20 = vld [vmem:[%s0 + $0x10] sm:$0xff]
    %v21 = vld [vmem:[%s0 + $0x18] sm:$0xff]
    %v22 = vld [vmem:[%s0 + $0x20] sm:$0xff]
    %v23 = vld [vmem:[%s0 + $0x28] sm:$0xff]
    %v24 = vld [vmem:[%s0 + $0x30] sm:$0xff]
    %v25 = vld [vmem:[%s0 + $0x38] sm:$0xff]
    %v26 = vld [vmem:[%s0 + $0x40] sm:$0xff]
    %v27 = vld [vmem:[%s0 + $0x48] sm:$0xff]
    %v28 = vld [vmem:[%s0 + $0x50] sm:$0xff]
    %v29 = vld [vmem:[%s0 + $0x58] sm:$0xff]
    %v30 = vld [vmem:[%s0 + $0x60] sm:$0xff]
    %v31 = vld [vmem:[%s0 + $0x68] sm:$0xff]
    %v32 = vld [vmem:[%s0 + $0x70] sm:$0xff]
    %v33 = vld [vmem:[%s0 + $0x78] sm:$0xff]
    %v34 = vld [vmem:[%s0 + $0x80] sm:$0xff]
    %v35 = vld [vmem:[%s0 + $0x88] sm:$0xff]
    %v36 = vld [vmem:[%s0 + $0x90] sm:$0xff]
    %v37 = vld [vmem:[%s0 + $0x98] sm:$0xff]
    %v38 = vld [vmem:[%s0 + $0xa0] sm:$0xff]
    %v39 = vld [vmem:[%s0 + $0xa8] sm:$0xff]
    %v40 = vld [vmem:[%s0 + $0xb0] sm:$0xff]
    %v41 = vld [vmem:[%s0 + $0xb8] sm:$0xff]
    %v42 = vld [vmem:[%s0 + $0xc0] sm:$0xff]
    %v43 = vld [vmem:[%s0 + $0xc8] sm:$0xff]
    %v44 = vld [vmem:[%s0 + $0xd0] sm:$0xff]
    %v45 = vld [vmem:[%s0 + $0xd8] sm:$0xff]
    %v46 = vld [vmem:[%s0 + $0xe0] sm:$0xff]
    %v47 = vld [vmem:[%s0 + $0xe8] sm:$0xff]
    %v48 = vld [vmem:[%s0 + $0xf0] sm:$0xff]
    %v49 = vld [vmem:[%s0 + $0xf8] sm:$0xff]
    %v50 = vld [vmem:[%s0 + $0x100] sm:$0xff]
    %v51 = vld [vmem:[%s0 + $0x108] sm:$0xff]
    %v52 = vld [vmem:[%s0 + $0x110] sm:$0xff]
    %v53 = vld [vmem:[%s0 + $0x118] sm:$0xff]
    %v54 = vld [vmem:[%s0 + $0x120] sm:$0xff]
    %v55 = vld [vmem:[%s0 + $0x128] sm:$0xff]
    %v56 = vld [vmem:[%s0 + $0x130] sm:$0xff]
    %v57 = vld [vmem:[%s0 + $0x138] sm:$0xff]
    %v58 = vld [vmem:[%s0 + $0x140] sm:$0xff]
    %v59 = vld [vmem:[%s0 + $0x148] sm:$0xff]
    %v60 = vld [vmem:[%s0 + $0x150] sm:$0xff]
    %v61 = vld [vmem:[%s0 + $0x158] sm:$0xff]
    %v62 = vld [vmem:[%s0 + $0x160] sm:$0xff]
    %v63 = vld [vmem:[%s0 + $0x168] sm:$0xff]
    %v64 = vld [vmem:[%s0 + $0x170] sm:$0xff]
    %v65 = vld [vmem:[%s0 + $0x178] sm:$0xff]
    %v66 = vld [vmem:[%s0 + $0x180] sm:$0xff]
    %v67 = vld [vmem:[%s0 + $0x188] sm:$0xff]
    %v68 = vld [vmem:[%s0 + $0x190] sm:$0xff]
    %v69 = vld [vmem:[%s0 + $0x198] sm:$0xff]
    %v70 = vld [vmem:[%s0 + $0x1a0] sm:$0xff]
    %v71 = vld [vmem:[%s0 + $0x1a8] sm:$0xff]
    %v72 = vld [vmem:[%s0 + $0x1b0] sm:$0xff]
    %v73 = vld [vmem:[%s0 + $0x1b8] sm:$0xff]
    %v74 = vld [vmem:[%s0 + $0x1c0] sm:$0xff]
    %v75 = vld [vmem:[%s0 + $0x1c8] sm:$0xff]
    %v76 = vld [vmem:[%s0 + $0x1d0] sm:$0xff]
    %v77 = vld [vmem:[%s0 + $0x1d8] sm:$0xff]
    %v78 = vld [vmem:[%s0 + $0x1e0] sm:$0xff]
    %v79 = vld [vmem:[%s0 + $0x1e8] sm:$0xff]
    %v80 = vld [vmem:[%s0 + $0x1f0] sm:$0xff]
    %v81 = vld [vmem:[%s0 + $0x1f8] sm:$0xff]
    %v82 = vld [vmem:[%s2] sm:$0xff]
    %v83 = vld [vmem:[%s2 + $0x8] sm:$0xff]
    %v84 = vld [vmem:[%s2 + $0x10] sm:$0xff]
    %v85 = vld [vmem:[%s2 + $0x18] sm:$0xff]
    %v86 = vld [vmem:[%s2 + $0x20] sm:$0xff]
    %v87 = vld [vmem:[%s2 + $0x28] sm:$0xff]
    %v88 = vld [vmem:[%s2 + $0x30] sm:$0xff]
    %v89 = vld [vmem:[%s2 + $0x38] sm:$0xff]
    %v90 = vld [vmem:[%s2 + $0x40] sm:$0xff]
    %v91 = vld [vmem:[%s2 + $0x48] sm:$0xff]
    %v92 = vld [vmem:[%s2 + $0x50] sm:$0xff]
    %v93 = vld [vmem:[%s2 + $0x58] sm:$0xff]
    %v94 = vld [vmem:[%s3] sm:$0x1]
    %v96 = vlaneseq
    %v97 = vshrl.u32 %v96, 7
    %v98 = vsub.s32 0, %v97
    %v99 = vrot.slane %v94, %v98
    %vm101 = vcmask 785408
    %v103 = vsel %vm101, %v18, 0
    %v106 = vsel %vm101, %v19, 0
    %v109 = vsel %vm101, %v20, 0
    %v112 = vsel %vm101, %v21, 0
    %v115 = vsel %vm101, %v22, 0
    %v118 = vsel %vm101, %v23, 0
    %v121 = vsel %vm101, %v24, 0
    %v124 = vsel %vm101, %v25, 0
    %v127 = vsel %vm101, %v26, 0
    %v130 = vsel %vm101, %v27, 0
    %v133 = vsel %vm101, %v28, 0
    %v136 = vsel %vm101, %v29, 0
    %v139 = vsel %vm101, %v30, 0
    %v142 = vsel %vm101, %v31, 0
    %v145 = vsel %vm101, %v32, 0
    %v148 = vsel %vm101, %v33, 0
    %v151 = vsel %vm101, %v34, 0
    %v154 = vsel %vm101, %v35, 0
    %v157 = vsel %vm101, %v36, 0
    %v160 = vsel %vm101, %v37, 0
    %v163 = vsel %vm101, %v38, 0
    %v166 = vsel %vm101, %v39, 0
    %v169 = vsel %vm101, %v40, 0
    %v172 = vsel %vm101, %v41, 0
    %v175 = vsel %vm101, %v42, 0
    %v178 = vsel %vm101, %v43, 0
    %v181 = vsel %vm101, %v44, 0
    %v184 = vsel %vm101, %v45, 0
    %v187 = vsel %vm101, %v46, 0
    %v190 = vsel %vm101, %v47, 0
    %v193 = vsel %vm101, %v48, 0
    %v196 = vsel %vm101, %v49, 0
    %v199 = vsel %vm101, %v50, 0
    %v202 = vsel %vm101, %v51, 0
    %v205 = vsel %vm101, %v52, 0
    %v208 = vsel %vm101, %v53, 0
    %v211 = vsel %vm101, %v54, 0
    %v214 = vsel %vm101, %v55, 0
    %v217 = vsel %vm101, %v56, 0
    %v220 = vsel %vm101, %v57, 0
    %v223 = vsel %vm101, %v58, 0
    %v226 = vsel %vm101, %v59, 0
    %v229 = vsel %vm101, %v60, 0
    %v232 = vsel %vm101, %v61, 0
    %v235 = vsel %vm101, %v62, 0
    %v238 = vsel %vm101, %v63, 0
    %v241 = vsel %vm101, %v64, 0
    %v244 = vsel %vm101, %v65, 0
    %v247 = vsel %vm101, %v66, 0
    %v250 = vsel %vm101, %v67, 0
    %v253 = vsel %vm101, %v68, 0
    %v256 = vsel %vm101, %v69, 0
    %v259 = vsel %vm101, %v70, 0
    %v262 = vsel %vm101, %v71, 0
    %v265 = vsel %vm101, %v72, 0
    %v268 = vsel %vm101, %v73, 0
    %v271 = vsel %vm101, %v74, 0
    %v274 = vsel %vm101, %v75, 0
    %v277 = vsel %vm101, %v76, 0
    %v280 = vsel %vm101, %v77, 0
    %v283 = vsel %vm101, %v78, 0
    %v286 = vsel %vm101, %v79, 0
    %v289 = vsel %vm101, %v80, 0
    %v292 = vsel %vm101, %v81, 0
    %294 = vmatprep.subr.mxu0 0.0
    %295 = vmatpush1.msra.mxu0 0.0
    %296 = vmatprep.subr.mxu0 0.0
    %297 = vmatpush1.msra.mxu0 0.0
    %298 = vmatprep.subr.mxu0 0.0
    %299 = vmatpush1.msra.mxu0 0.0
    %300 = vmatprep.subr.mxu0 0.0
    %301 = vmatpush1.msra.mxu0 0.0
    %302 = vmatprep.subr.mxu0 0.0
    %303 = vmatpush1.msra.mxu0 %v93
    %304 = vmatprep.subr.mxu0 0.0
    %305 = vmatpush1.msra.mxu0 %v92
    %306 = vmatprep.subr.mxu0 0.0
    %307 = vmatpush1.msra.mxu0 %v91
    %308 = vmatprep.subr.mxu0 0.0
    %309 = vmatpush1.msra.mxu0 %v90
    %310 = vmatprep.subr.mxu0 0.0
    %311 = vmatpush1.msra.mxu0 %v89
    %312 = vmatprep.subr.mxu0 0.0
    %313 = vmatpush1.msra.mxu0 %v88
    %314 = vmatprep.subr.mxu0 0.0
    %315 = vmatpush1.msra.mxu0 %v87
    %316 = vmatprep.subr.mxu0 0.0
    %317 = vmatpush1.msra.mxu0 %v86
    %318 = vmatprep.subr.mxu0 0.0
    %319 = vmatpush1.msra.mxu0 %v85
    %320 = vmatprep.subr.mxu0 0.0
    %321 = vmatpush1.msra.mxu0 %v84
    %322 = vmatprep.subr.mxu0 0.0
    %323 = vmatpush1.msra.mxu0 %v83
    %324 = vmatprep.subr.mxu0 0.0
    %325 = vmatpush1.msra.mxu0 %v82
    %326 = vmatprep.subr.mxu0 0.0
    %327 = vmatpush2.msra.mxu0 0.0
    %328 = vmatprep.subr.mxu0 0.0
    %329 = vmatpush2.msra.mxu0 0.0
    %330 = vmatprep.subr.mxu0 0.0
    %331 = vmatpush2.msra.mxu0 0.0
    %332 = vmatprep.subr.mxu0 0.0
    %333 = vmatpush2.msra.mxu0 0.0
    %334 = vmatprep.subr.mxu0 0.0
    %335 = vmatpush2.msra.mxu0 0.0
    %336 = vmatprep.subr.mxu0 0.0
    %337 = vmatpush2.msra.mxu0 0.0
    %338 = vmatprep.subr.mxu0 0.0
    %339 = vmatpush2.msra.mxu0 0.0
    %340 = vmatprep.subr.mxu0 0.0
    %341 = vmatpush2.msra.mxu0 0.0
    %342 = vmatprep.subr.mxu0 0.0
    %343 = vmatpush2.msra.mxu0 0.0
    %344 = vmatprep.subr.mxu0 0.0
    %345 = vmatpush2.msra.mxu0 0.0
    %346 = vmatprep.subr.mxu0 0.0
    %347 = vmatpush2.msra.mxu0 0.0
    %348 = vmatprep.subr.mxu0 0.0
    %349 = vmatpush2.msra.mxu0 0.0
    %350 = vmatprep.subr.mxu0 0.0
    %351 = vmatpush2.msra.mxu0 0.0
    %352 = vmatprep.subr.mxu0 0.0
    %353 = vmatpush2.msra.mxu0 0.0
    %354 = vmatprep.subr.mxu0 0.0
    %355 = vmatpush2.msra.mxu0 0.0
    %356 = vmatprep.subr.mxu0 0.0
    %357 = vmatpush2.msra.mxu0 0.0
    %358 = vmatprep.mubr.f32.mxu0 0.0
    %359 = vmatmul.mubr.f32.gmra.mxu0 %v103
    %v360 = vpop.f32.mrf.mxu0
    %v361 = vadd.f32 %v99, %v360
    %v362 = vpop.f32.mrf.mxu0
    %363 = vmatprep.mubr.f32.mxu0 0.0
    %364 = vmatmul.mubr.f32.gmra.mxu0 %v106
    %v365 = vpop.f32.mrf.mxu0
    %v366 = vadd.f32 %v99, %v365
    %v367 = vpop.f32.mrf.mxu0
    %368 = vmatprep.mubr.f32.mxu0 0.0
    %369 = vmatmul.mubr.f32.gmra.mxu0 %v109
    %v370 = vpop.f32.mrf.mxu0
    %v371 = vadd.f32 %v99, %v370
    %v372 = vpop.f32.mrf.mxu0
    %373 = vmatprep.mubr.f32.mxu0 0.0
    %374 = vmatmul.mubr.f32.gmra.mxu0 %v112
    %v375 = vpop.f32.mrf.mxu0
    %v376 = vadd.f32 %v99, %v375
    %v377 = vpop.f32.mrf.mxu0
    %378 = vmatprep.mubr.f32.mxu0 0.0
    %379 = vmatmul.mubr.f32.gmra.mxu0 %v115
    %v380 = vpop.f32.mrf.mxu0
    %v381 = vadd.f32 %v99, %v380
    %v382 = vpop.f32.mrf.mxu0
    %383 = vmatprep.mubr.f32.mxu0 0.0
    %384 = vmatmul.mubr.f32.gmra.mxu0 %v118
    %v385 = vpop.f32.mrf.mxu0
    %v386 = vadd.f32 %v99, %v385
    %v387 = vpop.f32.mrf.mxu0
    %388 = vmatprep.mubr.f32.mxu0 0.0
    %389 = vmatmul.mubr.f32.gmra.mxu0 %v121
    %v390 = vpop.f32.mrf.mxu0
    %v391 = vadd.f32 %v99, %v390
    %v392 = vpop.f32.mrf.mxu0
    %393 = vmatprep.mubr.f32.mxu0 0.0
    %394 = vmatmul.mubr.f32.gmra.mxu0 %v124
    %v395 = vpop.f32.mrf.mxu0
    %v396 = vadd.f32 %v99, %v395
    %v397 = vpop.f32.mrf.mxu0
    %398 = vmatprep.mubr.f32.mxu0 0.0
    %399 = vmatmul.mubr.f32.gmra.mxu0 %v127
    %v400 = vpop.f32.mrf.mxu0
    %v401 = vadd.f32 %v99, %v400
    %v402 = vpop.f32.mrf.mxu0
    %403 = vmatprep.mubr.f32.mxu0 0.0
    %404 = vmatmul.mubr.f32.gmra.mxu0 %v130
    %v405 = vpop.f32.mrf.mxu0
    %v406 = vadd.f32 %v99, %v405
    %v407 = vpop.f32.mrf.mxu0
    %408 = vmatprep.mubr.f32.mxu0 0.0
    %409 = vmatmul.mubr.f32.gmra.mxu0 %v133
    %v410 = vpop.f32.mrf.mxu0
    %v411 = vadd.f32 %v99, %v410
    %v412 = vpop.f32.mrf.mxu0
    %413 = vmatprep.mubr.f32.mxu0 0.0
    %414 = vmatmul.mubr.f32.gmra.mxu0 %v136
    %v415 = vpop.f32.mrf.mxu0
    %v416 = vadd.f32 %v99, %v415
    %v417 = vpop.f32.mrf.mxu0
    %418 = vmatprep.mubr.f32.mxu0 0.0
    %419 = vmatmul.mubr.f32.gmra.mxu0 %v139
    %v420 = vpop.f32.mrf.mxu0
    %v421 = vadd.f32 %v99, %v420
    %v422 = vpop.f32.mrf.mxu0
    %423 = vmatprep.mubr.f32.mxu0 0.0
    %424 = vmatmul.mubr.f32.gmra.mxu0 %v142
    %v425 = vpop.f32.mrf.mxu0
    %v426 = vadd.f32 %v99, %v425
    %v427 = vpop.f32.mrf.mxu0
    %428 = vmatprep.mubr.f32.mxu0 0.0
    %429 = vmatmul.mubr.f32.gmra.mxu0 %v145
    %v430 = vpop.f32.mrf.mxu0
    %v431 = vadd.f32 %v99, %v430
    %v432 = vpop.f32.mrf.mxu0
    %433 = vmatprep.mubr.f32.mxu0 0.0
    %434 = vmatmul.mubr.f32.gmra.mxu0 %v148
    %v435 = vpop.f32.mrf.mxu0
    %v436 = vadd.f32 %v99, %v435
    %v437 = vpop.f32.mrf.mxu0
    %438 = vmatprep.mubr.f32.mxu0 0.0
    %439 = vmatmul.mubr.f32.gmra.mxu0 %v151
    %v440 = vpop.f32.mrf.mxu0
    %v441 = vadd.f32 %v99, %v440
    %v442 = vpop.f32.mrf.mxu0
    %443 = vmatprep.mubr.f32.mxu0 0.0
    %444 = vmatmul.mubr.f32.gmra.mxu0 %v154
    %v445 = vpop.f32.mrf.mxu0
    %v446 = vadd.f32 %v99, %v445
    %v447 = vpop.f32.mrf.mxu0
    %448 = vmatprep.mubr.f32.mxu0 0.0
    %449 = vmatmul.mubr.f32.gmra.mxu0 %v157
    %v450 = vpop.f32.mrf.mxu0
    %v451 = vadd.f32 %v99, %v450
    %v452 = vpop.f32.mrf.mxu0
    %453 = vmatprep.mubr.f32.mxu0 0.0
    %454 = vmatmul.mubr.f32.gmra.mxu0 %v160
    %v455 = vpop.f32.mrf.mxu0
    %v456 = vadd.f32 %v99, %v455
    %v457 = vpop.f32.mrf.mxu0
    %458 = vmatprep.mubr.f32.mxu0 0.0
    %459 = vmatmul.mubr.f32.gmra.mxu0 %v163
    %v460 = vpop.f32.mrf.mxu0
    %v461 = vadd.f32 %v99, %v460
    %v462 = vpop.f32.mrf.mxu0
    %463 = vmatprep.mubr.f32.mxu0 0.0
    %464 = vmatmul.mubr.f32.gmra.mxu0 %v166
    %v465 = vpop.f32.mrf.mxu0
    %v466 = vadd.f32 %v99, %v465
    %v467 = vpop.f32.mrf.mxu0
    %468 = vmatprep.mubr.f32.mxu0 0.0
    %469 = vmatmul.mubr.f32.gmra.mxu0 %v169
    %v470 = vpop.f32.mrf.mxu0
    %v471 = vadd.f32 %v99, %v470
    %v472 = vpop.f32.mrf.mxu0
    %473 = vmatprep.mubr.f32.mxu0 0.0
    %474 = vmatmul.mubr.f32.gmra.mxu0 %v172
    %v475 = vpop.f32.mrf.mxu0
    %v476 = vadd.f32 %v99, %v475
    %v477 = vpop.f32.mrf.mxu0
    %478 = vmatprep.mubr.f32.mxu0 0.0
    %479 = vmatmul.mubr.f32.gmra.mxu0 %v175
    %v480 = vpop.f32.mrf.mxu0
    %v481 = vadd.f32 %v99, %v480
    %v482 = vpop.f32.mrf.mxu0
    %483 = vmatprep.mubr.f32.mxu0 0.0
    %484 = vmatmul.mubr.f32.gmra.mxu0 %v178
    %v485 = vpop.f32.mrf.mxu0
    %v486 = vadd.f32 %v99, %v485
    %v487 = vpop.f32.mrf.mxu0
    %488 = vmatprep.mubr.f32.mxu0 0.0
    %489 = vmatmul.mubr.f32.gmra.mxu0 %v181
    %v490 = vpop.f32.mrf.mxu0
    %v491 = vadd.f32 %v99, %v490
    %v492 = vpop.f32.mrf.mxu0
    %493 = vmatprep.mubr.f32.mxu0 0.0
    %494 = vmatmul.mubr.f32.gmra.mxu0 %v184
    %v495 = vpop.f32.mrf.mxu0
    %v496 = vadd.f32 %v99, %v495
    %v497 = vpop.f32.mrf.mxu0
    %498 = vmatprep.mubr.f32.mxu0 0.0
    %499 = vmatmul.mubr.f32.gmra.mxu0 %v187
    %v500 = vpop.f32.mrf.mxu0
    %v501 = vadd.f32 %v99, %v500
    %v502 = vpop.f32.mrf.mxu0
    %503 = vmatprep.mubr.f32.mxu0 0.0
    %504 = vmatmul.mubr.f32.gmra.mxu0 %v190
    %v505 = vpop.f32.mrf.mxu0
    %v506 = vadd.f32 %v99, %v505
    %v507 = vpop.f32.mrf.mxu0
    %508 = vmatprep.mubr.f32.mxu0 0.0
    %509 = vmatmul.mubr.f32.gmra.mxu0 %v193
    %v510 = vpop.f32.mrf.mxu0
    %v511 = vadd.f32 %v99, %v510
    %v512 = vpop.f32.mrf.mxu0
    %513 = vmatprep.mubr.f32.mxu0 0.0
    %514 = vmatmul.mubr.f32.gmra.mxu0 %v196
    %v515 = vpop.f32.mrf.mxu0
    %v516 = vadd.f32 %v99, %v515
    %v517 = vpop.f32.mrf.mxu0
    %518 = vmatprep.mubr.f32.mxu0 0.0
    %519 = vmatmul.mubr.f32.gmra.mxu0 %v199
    %v520 = vpop.f32.mrf.mxu0
    %v521 = vadd.f32 %v99, %v520
    %v522 = vpop.f32.mrf.mxu0
    %523 = vmatprep.mubr.f32.mxu0 0.0
    %524 = vmatmul.mubr.f32.gmra.mxu0 %v202
    %v525 = vpop.f32.mrf.mxu0
    %v526 = vadd.f32 %v99, %v525
    %v527 = vpop.f32.mrf.mxu0
    %528 = vmatprep.mubr.f32.mxu0 0.0
    %529 = vmatmul.mubr.f32.gmra.mxu0 %v205
    %v530 = vpop.f32.mrf.mxu0
    %v531 = vadd.f32 %v99, %v530
    %v532 = vpop.f32.mrf.mxu0
    %533 = vmatprep.mubr.f32.mxu0 0.0
    %534 = vmatmul.mubr.f32.gmra.mxu0 %v208
    %v535 = vpop.f32.mrf.mxu0
    %v536 = vadd.f32 %v99, %v535
    %v537 = vpop.f32.mrf.mxu0
    %538 = vmatprep.mubr.f32.mxu0 0.0
    %539 = vmatmul.mubr.f32.gmra.mxu0 %v211
    %v540 = vpop.f32.mrf.mxu0
    %v541 = vadd.f32 %v99, %v540
    %v542 = vpop.f32.mrf.mxu0
    %543 = vmatprep.mubr.f32.mxu0 0.0
    %544 = vmatmul.mubr.f32.gmra.mxu0 %v214
    %v545 = vpop.f32.mrf.mxu0
    %v546 = vadd.f32 %v99, %v545
    %v547 = vpop.f32.mrf.mxu0
    %548 = vmatprep.mubr.f32.mxu0 0.0
    %549 = vmatmul.mubr.f32.gmra.mxu0 %v217
    %v550 = vpop.f32.mrf.mxu0
    %v551 = vadd.f32 %v99, %v550
    %v552 = vpop.f32.mrf.mxu0
    %553 = vmatprep.mubr.f32.mxu0 0.0
    %554 = vmatmul.mubr.f32.gmra.mxu0 %v220
    %v555 = vpop.f32.mrf.mxu0
    %v556 = vadd.f32 %v99, %v555
    %v557 = vpop.f32.mrf.mxu0
    %558 = vmatprep.mubr.f32.mxu0 0.0
    %559 = vmatmul.mubr.f32.gmra.mxu0 %v223
    %v560 = vpop.f32.mrf.mxu0
    %v561 = vadd.f32 %v99, %v560
    %v562 = vpop.f32.mrf.mxu0
    %563 = vmatprep.mubr.f32.mxu0 0.0
    %564 = vmatmul.mubr.f32.gmra.mxu0 %v226
    %v565 = vpop.f32.mrf.mxu0
    %v566 = vadd.f32 %v99, %v565
    %v567 = vpop.f32.mrf.mxu0
    %568 = vmatprep.mubr.f32.mxu0 0.0
    %569 = vmatmul.mubr.f32.gmra.mxu0 %v229
    %v570 = vpop.f32.mrf.mxu0
    %v571 = vadd.f32 %v99, %v570
    %v572 = vpop.f32.mrf.mxu0
    %573 = vmatprep.mubr.f32.mxu0 0.0
    %574 = vmatmul.mubr.f32.gmra.mxu0 %v232
    %v575 = vpop.f32.mrf.mxu0
    %v576 = vadd.f32 %v99, %v575
    %v577 = vpop.f32.mrf.mxu0
    %578 = vmatprep.mubr.f32.mxu0 0.0
    %579 = vmatmul.mubr.f32.gmra.mxu0 %v235
    %v580 = vpop.f32.mrf.mxu0
    %v581 = vadd.f32 %v99, %v580
    %v582 = vpop.f32.mrf.mxu0
    %583 = vmatprep.mubr.f32.mxu0 0.0
    %584 = vmatmul.mubr.f32.gmra.mxu0 %v238
    %v585 = vpop.f32.mrf.mxu0
    %v586 = vadd.f32 %v99, %v585
    %v587 = vpop.f32.mrf.mxu0
    %588 = vmatprep.mubr.f32.mxu0 0.0
    %589 = vmatmul.mubr.f32.gmra.mxu0 %v241
    %v590 = vpop.f32.mrf.mxu0
    %v591 = vadd.f32 %v99, %v590
    %v592 = vpop.f32.mrf.mxu0
    %593 = vmatprep.mubr.f32.mxu0 0.0
    %594 = vmatmul.mubr.f32.gmra.mxu0 %v244
    %v595 = vpop.f32.mrf.mxu0
    %v596 = vadd.f32 %v99, %v595
    %v597 = vpop.f32.mrf.mxu0
    %598 = vmatprep.mubr.f32.mxu0 0.0
    %599 = vmatmul.mubr.f32.gmra.mxu0 %v247
    %v600 = vpop.f32.mrf.mxu0
    %v601 = vadd.f32 %v99, %v600
    %v602 = vpop.f32.mrf.mxu0
    %603 = vmatprep.mubr.f32.mxu0 0.0
    %604 = vmatmul.mubr.f32.gmra.mxu0 %v250
    %v605 = vpop.f32.mrf.mxu0
    %v606 = vadd.f32 %v99, %v605
    %v607 = vpop.f32.mrf.mxu0
    %608 = vmatprep.mubr.f32.mxu0 0.0
    %609 = vmatmul.mubr.f32.gmra.mxu0 %v253
    %v610 = vpop.f32.mrf.mxu0
    %v611 = vadd.f32 %v99, %v610
    %v612 = vpop.f32.mrf.mxu0
    %613 = vmatprep.mubr.f32.mxu0 0.0
    %614 = vmatmul.mubr.f32.gmra.mxu0 %v256
    %v615 = vpop.f32.mrf.mxu0
    %v616 = vadd.f32 %v99, %v615
    %v617 = vpop.f32.mrf.mxu0
    %618 = vmatprep.mubr.f32.mxu0 0.0
    %619 = vmatmul.mubr.f32.gmra.mxu0 %v259
    %v620 = vpop.f32.mrf.mxu0
    %v621 = vadd.f32 %v99, %v620
    %v622 = vpop.f32.mrf.mxu0
    %623 = vmatprep.mubr.f32.mxu0 0.0
    %624 = vmatmul.mubr.f32.gmra.mxu0 %v262
    %v625 = vpop.f32.mrf.mxu0
    %v626 = vadd.f32 %v99, %v625
    %v627 = vpop.f32.mrf.mxu0
    %628 = vmatprep.mubr.f32.mxu0 0.0
    %629 = vmatmul.mubr.f32.gmra.mxu0 %v265
    %v630 = vpop.f32.mrf.mxu0
    %v631 = vadd.f32 %v99, %v630
    %v632 = vpop.f32.mrf.mxu0
    %633 = vmatprep.mubr.f32.mxu0 0.0
    %634 = vmatmul.mubr.f32.gmra.mxu0 %v268
    %v635 = vpop.f32.mrf.mxu0
    %v636 = vadd.f32 %v99, %v635
    %v637 = vpop.f32.mrf.mxu0
    %638 = vmatprep.mubr.f32.mxu0 0.0
    %639 = vmatmul.mubr.f32.gmra.mxu0 %v271
    %v640 = vpop.f32.mrf.mxu0
    %v641 = vadd.f32 %v99, %v640
    %v642 = vpop.f32.mrf.mxu0
    %643 = vmatprep.mubr.f32.mxu0 0.0
    %644 = vmatmul.mubr.f32.gmra.mxu0 %v274
    %v645 = vpop.f32.mrf.mxu0
    %v646 = vadd.f32 %v99, %v645
    %v647 = vpop.f32.mrf.mxu0
    %648 = vmatprep.mubr.f32.mxu0 0.0
    %649 = vmatmul.mubr.f32.gmra.mxu0 %v277
    %v650 = vpop.f32.mrf.mxu0
    %v651 = vadd.f32 %v99, %v650
    %v652 = vpop.f32.mrf.mxu0
    %653 = vmatprep.mubr.f32.mxu0 0.0
    %654 = vmatmul.mubr.f32.gmra.mxu0 %v280
    %v655 = vpop.f32.mrf.mxu0
    %v656 = vadd.f32 %v99, %v655
    %v657 = vpop.f32.mrf.mxu0
    %658 = vmatprep.mubr.f32.mxu0 0.0
    %659 = vmatmul.mubr.f32.gmra.mxu0 %v283
    %v660 = vpop.f32.mrf.mxu0
    %v661 = vadd.f32 %v99, %v660
    %v662 = vpop.f32.mrf.mxu0
    %663 = vmatprep.mubr.f32.mxu0 0.0
    %664 = vmatmul.mubr.f32.gmra.mxu0 %v286
    %v665 = vpop.f32.mrf.mxu0
    %v666 = vadd.f32 %v99, %v665
    %v667 = vpop.f32.mrf.mxu0
    %668 = vmatprep.mubr.f32.mxu0 0.0
    %669 = vmatmul.mubr.f32.gmra.mxu0 %v289
    %v670 = vpop.f32.mrf.mxu0
    %v671 = vadd.f32 %v99, %v670
    %v672 = vpop.f32.mrf.mxu0
    %673 = vmatprep.mubr.f32.mxu0 0.0
    %674 = vmatmul.mubr.f32.gmra.mxu0 %v292
    %v675 = vpop.f32.mrf.mxu0
    %v676 = vadd.f32 %v99, %v675
    %v677 = vpop.f32.mrf.mxu0
    %678 = vdwg.mxu0
    %v679 = vld [vmem:[%s1] sm:$0xff]
    %v680 = vld [vmem:[%s1 + $0x8] sm:$0xff]
    %v681 = vld [vmem:[%s1 + $0x10] sm:$0xff]
    %v682 = vld [vmem:[%s1 + $0x18] sm:$0xff]
    %v683 = vld [vmem:[%s1 + $0x20] sm:$0xff]
    %v684 = vld [vmem:[%s1 + $0x28] sm:$0xff]
    %v685 = vld [vmem:[%s1 + $0x30] sm:$0xff]
    %v686 = vld [vmem:[%s1 + $0x38] sm:$0xff]
    %v687 = vld [vmem:[%s1 + $0x40] sm:$0xff]
    %v688 = vld [vmem:[%s1 + $0x48] sm:$0xff]
    %v689 = vld [vmem:[%s1 + $0x50] sm:$0xff]
    %v690 = vld [vmem:[%s1 + $0x58] sm:$0xff]
    %v691 = vld [vmem:[%s1 + $0x60] sm:$0xff]
    %v692 = vld [vmem:[%s1 + $0x68] sm:$0xff]
    %v693 = vld [vmem:[%s1 + $0x70] sm:$0xff]
    %v694 = vld [vmem:[%s1 + $0x78] sm:$0xff]
    %v695 = vld [vmem:[%s1 + $0x80] sm:$0xff]
    %v696 = vld [vmem:[%s1 + $0x88] sm:$0xff]
    %v697 = vld [vmem:[%s1 + $0x90] sm:$0xff]
    %v698 = vld [vmem:[%s1 + $0x98] sm:$0xff]
    %v699 = vld [vmem:[%s1 + $0xa0] sm:$0xff]
    %v700 = vld [vmem:[%s1 + $0xa8] sm:$0xff]
    %v701 = vld [vmem:[%s1 + $0xb0] sm:$0xff]
    %v702 = vld [vmem:[%s1 + $0xb8] sm:$0xff]
    %v703 = vld [vmem:[%s1 + $0xc0] sm:$0xff]
    %v704 = vld [vmem:[%s1 + $0xc8] sm:$0xff]
    %v705 = vld [vmem:[%s1 + $0xd0] sm:$0xff]
    %v706 = vld [vmem:[%s1 + $0xd8] sm:$0xff]
    %v707 = vld [vmem:[%s1 + $0xe0] sm:$0xff]
    %v708 = vld [vmem:[%s1 + $0xe8] sm:$0xff]
    %v709 = vld [vmem:[%s1 + $0xf0] sm:$0xff]
    %v710 = vld [vmem:[%s1 + $0xf8] sm:$0xff]
    %v711 = vld [vmem:[%s1 + $0x100] sm:$0xff]
    %v712 = vld [vmem:[%s1 + $0x108] sm:$0xff]
    %v713 = vld [vmem:[%s1 + $0x110] sm:$0xff]
    %v714 = vld [vmem:[%s1 + $0x118] sm:$0xff]
    %v715 = vld [vmem:[%s1 + $0x120] sm:$0xff]
    %v716 = vld [vmem:[%s1 + $0x128] sm:$0xff]
    %v717 = vld [vmem:[%s1 + $0x130] sm:$0xff]
    %v718 = vld [vmem:[%s1 + $0x138] sm:$0xff]
    %v719 = vld [vmem:[%s1 + $0x140] sm:$0xff]
    %v720 = vld [vmem:[%s1 + $0x148] sm:$0xff]
    %v721 = vld [vmem:[%s1 + $0x150] sm:$0xff]
    %v722 = vld [vmem:[%s1 + $0x158] sm:$0xff]
    %v723 = vld [vmem:[%s1 + $0x160] sm:$0xff]
    %v724 = vld [vmem:[%s1 + $0x168] sm:$0xff]
    %v725 = vld [vmem:[%s1 + $0x170] sm:$0xff]
    %v726 = vld [vmem:[%s1 + $0x178] sm:$0xff]
    %v727 = vld [vmem:[%s1 + $0x180] sm:$0xff]
    %v728 = vld [vmem:[%s1 + $0x188] sm:$0xff]
    %v729 = vld [vmem:[%s1 + $0x190] sm:$0xff]
    %v730 = vld [vmem:[%s1 + $0x198] sm:$0xff]
    %v731 = vld [vmem:[%s1 + $0x1a0] sm:$0xff]
    %v732 = vld [vmem:[%s1 + $0x1a8] sm:$0xff]
    %v733 = vld [vmem:[%s1 + $0x1b0] sm:$0xff]
    %v734 = vld [vmem:[%s1 + $0x1b8] sm:$0xff]
    %v735 = vld [vmem:[%s1 + $0x1c0] sm:$0xff]
    %v736 = vld [vmem:[%s1 + $0x1c8] sm:$0xff]
    %v737 = vld [vmem:[%s1 + $0x1d0] sm:$0xff]
    %v738 = vld [vmem:[%s1 + $0x1d8] sm:$0xff]
    %v739 = vld [vmem:[%s1 + $0x1e0] sm:$0xff]
    %v740 = vld [vmem:[%s1 + $0x1e8] sm:$0xff]
    %v741 = vld [vmem:[%s1 + $0x1f0] sm:$0xff]
    %v742 = vld [vmem:[%s1 + $0x1f8] sm:$0xff]
    %v743 = vmul.f32 %v361, %v679
    %v744 = vmul.f32 %v366, %v680
    %v745 = vmul.f32 %v371, %v681
    %v746 = vmul.f32 %v376, %v682
    %v747 = vmul.f32 %v381, %v683
    %v748 = vmul.f32 %v386, %v684
    %v749 = vmul.f32 %v391, %v685
    %v750 = vmul.f32 %v396, %v686
    %v751 = vmul.f32 %v401, %v687
    %v752 = vmul.f32 %v406, %v688
    %v753 = vmul.f32 %v411, %v689
    %v754 = vmul.f32 %v416, %v690
    %v755 = vmul.f32 %v421, %v691
    %v756 = vmul.f32 %v426, %v692
    %v757 = vmul.f32 %v431, %v693
    %v758 = vmul.f32 %v436, %v694
    %v759 = vmul.f32 %v441, %v695
    %v760 = vmul.f32 %v446, %v696
    %v761 = vmul.f32 %v451, %v697
    %v762 = vmul.f32 %v456, %v698
    %v763 = vmul.f32 %v461, %v699
    %v764 = vmul.f32 %v466, %v700
    %v765 = vmul.f32 %v471, %v701
    %v766 = vmul.f32 %v476, %v702
    %v767 = vmul.f32 %v481, %v703
    %v768 = vmul.f32 %v486, %v704
    %v769 = vmul.f32 %v491, %v705
    %v770 = vmul.f32 %v496, %v706
    %v771 = vmul.f32 %v501, %v707
    %v772 = vmul.f32 %v506, %v708
    %v773 = vmul.f32 %v511, %v709
    %v774 = vmul.f32 %v516, %v710
    %v775 = vmul.f32 %v521, %v711
    %v776 = vmul.f32 %v526, %v712
    %v777 = vmul.f32 %v531, %v713
    %v778 = vmul.f32 %v536, %v714
    %v779 = vmul.f32 %v541, %v715
    %v780 = vmul.f32 %v546, %v716
    %v781 = vmul.f32 %v551, %v717
    %v782 = vmul.f32 %v556, %v718
    %v783 = vmul.f32 %v561, %v719
    %v784 = vmul.f32 %v566, %v720
    %v785 = vmul.f32 %v571, %v721
    %v786 = vmul.f32 %v576, %v722
    %v787 = vmul.f32 %v581, %v723
    %v788 = vmul.f32 %v586, %v724
    %v789 = vmul.f32 %v591, %v725
    %v790 = vmul.f32 %v596, %v726
    %v791 = vmul.f32 %v601, %v727
    %v792 = vmul.f32 %v606, %v728
    %v793 = vmul.f32 %v611, %v729
    %v794 = vmul.f32 %v616, %v730
    %v795 = vmul.f32 %v621, %v731
    %v796 = vmul.f32 %v626, %v732
    %v797 = vmul.f32 %v631, %v733
    %v798 = vmul.f32 %v636, %v734
    %v799 = vmul.f32 %v641, %v735
    %v800 = vmul.f32 %v646, %v736
    %v801 = vmul.f32 %v651, %v737
    %v802 = vmul.f32 %v656, %v738
    %v803 = vmul.f32 %v661, %v739
    %v804 = vmul.f32 %v666, %v740
    %v805 = vmul.f32 %v671, %v741
    %v806 = vmul.f32 %v676, %v742
    %v807 = vrot.slane %v743, 4
    %v808 = vmax.f32 %v743, %v807
    %v809 = vrot.slane %v808, 2
    %v810 = vmax.f32 %v808, %v809
    %v811 = vrot.slane %v810, 1
    %v812 = vmax.f32 %v810, %v811
    %v813 = vrot.slane %v744, 4
    %v814 = vmax.f32 %v744, %v813
    %v815 = vrot.slane %v814, 2
    %v816 = vmax.f32 %v814, %v815
    %v817 = vrot.slane %v816, 1
    %v818 = vmax.f32 %v816, %v817
    %v819 = vrot.slane %v745, 4
    %v820 = vmax.f32 %v745, %v819
    %v821 = vrot.slane %v820, 2
    %v822 = vmax.f32 %v820, %v821
    %v823 = vrot.slane %v822, 1
    %v824 = vmax.f32 %v822, %v823
    %v825 = vrot.slane %v746, 4
    %v826 = vmax.f32 %v746, %v825
    %v827 = vrot.slane %v826, 2
    %v828 = vmax.f32 %v826, %v827
    %v829 = vrot.slane %v828, 1
    %v830 = vmax.f32 %v828, %v829
    %v831 = vrot.slane %v747, 4
    %v832 = vmax.f32 %v747, %v831
    %v833 = vrot.slane %v832, 2
    %v834 = vmax.f32 %v832, %v833
    %v835 = vrot.slane %v834, 1
    %v836 = vmax.f32 %v834, %v835
    %v837 = vrot.slane %v748, 4
    %v838 = vmax.f32 %v748, %v837
    %v839 = vrot.slane %v838, 2
    %v840 = vmax.f32 %v838, %v839
    %v841 = vrot.slane %v840, 1
    %v842 = vmax.f32 %v840, %v841
    %v843 = vrot.slane %v749, 4
    %v844 = vmax.f32 %v749, %v843
    %v845 = vrot.slane %v844, 2
    %v846 = vmax.f32 %v844, %v845
    %v847 = vrot.slane %v846, 1
    %v848 = vmax.f32 %v846, %v847
    %v849 = vrot.slane %v750, 4
    %v850 = vmax.f32 %v750, %v849
    %v851 = vrot.slane %v850, 2
    %v852 = vmax.f32 %v850, %v851
    %v853 = vrot.slane %v852, 1
    %v854 = vmax.f32 %v852, %v853
    %v855 = vrot.slane %v751, 4
    %v856 = vmax.f32 %v751, %v855
    %v857 = vrot.slane %v856, 2
    %v858 = vmax.f32 %v856, %v857
    %v859 = vrot.slane %v858, 1
    %v860 = vmax.f32 %v858, %v859
    %v861 = vrot.slane %v752, 4
    %v862 = vmax.f32 %v752, %v861
    %v863 = vrot.slane %v862, 2
    %v864 = vmax.f32 %v862, %v863
    %v865 = vrot.slane %v864, 1
    %v866 = vmax.f32 %v864, %v865
    %v867 = vrot.slane %v753, 4
    %v868 = vmax.f32 %v753, %v867
    %v869 = vrot.slane %v868, 2
    %v870 = vmax.f32 %v868, %v869
    %v871 = vrot.slane %v870, 1
    %v872 = vmax.f32 %v870, %v871
    %v873 = vrot.slane %v754, 4
    %v874 = vmax.f32 %v754, %v873
    %v875 = vrot.slane %v874, 2
    %v876 = vmax.f32 %v874, %v875
    %v877 = vrot.slane %v876, 1
    %v878 = vmax.f32 %v876, %v877
    %v879 = vrot.slane %v755, 4
    %v880 = vmax.f32 %v755, %v879
    %v881 = vrot.slane %v880, 2
    %v882 = vmax.f32 %v880, %v881
    %v883 = vrot.slane %v882, 1
    %v884 = vmax.f32 %v882, %v883
    %v885 = vrot.slane %v756, 4
    %v886 = vmax.f32 %v756, %v885
    %v887 = vrot.slane %v886, 2
    %v888 = vmax.f32 %v886, %v887
    %v889 = vrot.slane %v888, 1
    %v890 = vmax.f32 %v888, %v889
    %v891 = vrot.slane %v757, 4
    %v892 = vmax.f32 %v757, %v891
    %v893 = vrot.slane %v892, 2
    %v894 = vmax.f32 %v892, %v893
    %v895 = vrot.slane %v894, 1
    %v896 = vmax.f32 %v894, %v895
    %v897 = vrot.slane %v758, 4
    %v898 = vmax.f32 %v758, %v897
    %v899 = vrot.slane %v898, 2
    %v900 = vmax.f32 %v898, %v899
    %v901 = vrot.slane %v900, 1
    %v902 = vmax.f32 %v900, %v901
    %v903 = vrot.slane %v759, 4
    %v904 = vmax.f32 %v759, %v903
    %v905 = vrot.slane %v904, 2
    %v906 = vmax.f32 %v904, %v905
    %v907 = vrot.slane %v906, 1
    %v908 = vmax.f32 %v906, %v907
    %v909 = vrot.slane %v760, 4
    %v910 = vmax.f32 %v760, %v909
    %v911 = vrot.slane %v910, 2
    %v912 = vmax.f32 %v910, %v911
    %v913 = vrot.slane %v912, 1
    %v914 = vmax.f32 %v912, %v913
    %v915 = vrot.slane %v761, 4
    %v916 = vmax.f32 %v761, %v915
    %v917 = vrot.slane %v916, 2
    %v918 = vmax.f32 %v916, %v917
    %v919 = vrot.slane %v918, 1
    %v920 = vmax.f32 %v918, %v919
    %v921 = vrot.slane %v762, 4
    %v922 = vmax.f32 %v762, %v921
    %v923 = vrot.slane %v922, 2
    %v924 = vmax.f32 %v922, %v923
    %v925 = vrot.slane %v924, 1
    %v926 = vmax.f32 %v924, %v925
    %v927 = vrot.slane %v763, 4
    %v928 = vmax.f32 %v763, %v927
    %v929 = vrot.slane %v928, 2
    %v930 = vmax.f32 %v928, %v929
    %v931 = vrot.slane %v930, 1
    %v932 = vmax.f32 %v930, %v931
    %v933 = vrot.slane %v764, 4
    %v934 = vmax.f32 %v764, %v933
    %v935 = vrot.slane %v934, 2
    %v936 = vmax.f32 %v934, %v935
    %v937 = vrot.slane %v936, 1
    %v938 = vmax.f32 %v936, %v937
    %v939 = vrot.slane %v765, 4
    %v940 = vmax.f32 %v765, %v939
    %v941 = vrot.slane %v940, 2
    %v942 = vmax.f32 %v940, %v941
    %v943 = vrot.slane %v942, 1
    %v944 = vmax.f32 %v942, %v943
    %v945 = vrot.slane %v766, 4
    %v946 = vmax.f32 %v766, %v945
    %v947 = vrot.slane %v946, 2
    %v948 = vmax.f32 %v946, %v947
    %v949 = vrot.slane %v948, 1
    %v950 = vmax.f32 %v948, %v949
    %v951 = vrot.slane %v767, 4
    %v952 = vmax.f32 %v767, %v951
    %v953 = vrot.slane %v952, 2
    %v954 = vmax.f32 %v952, %v953
    %v955 = vrot.slane %v954, 1
    %v956 = vmax.f32 %v954, %v955
    %v957 = vrot.slane %v768, 4
    %v958 = vmax.f32 %v768, %v957
    %v959 = vrot.slane %v958, 2
    %v960 = vmax.f32 %v958, %v959
    %v961 = vrot.slane %v960, 1
    %v962 = vmax.f32 %v960, %v961
    %v963 = vrot.slane %v769, 4
    %v964 = vmax.f32 %v769, %v963
    %v965 = vrot.slane %v964, 2
    %v966 = vmax.f32 %v964, %v965
    %v967 = vrot.slane %v966, 1
    %v968 = vmax.f32 %v966, %v967
    %v969 = vrot.slane %v770, 4
    %v970 = vmax.f32 %v770, %v969
    %v971 = vrot.slane %v970, 2
    %v972 = vmax.f32 %v970, %v971
    %v973 = vrot.slane %v972, 1
    %v974 = vmax.f32 %v972, %v973
    %v975 = vrot.slane %v771, 4
    %v976 = vmax.f32 %v771, %v975
    %v977 = vrot.slane %v976, 2
    %v978 = vmax.f32 %v976, %v977
    %v979 = vrot.slane %v978, 1
    %v980 = vmax.f32 %v978, %v979
    %v981 = vrot.slane %v772, 4
    %v982 = vmax.f32 %v772, %v981
    %v983 = vrot.slane %v982, 2
    %v984 = vmax.f32 %v982, %v983
    %v985 = vrot.slane %v984, 1
    %v986 = vmax.f32 %v984, %v985
    %v987 = vrot.slane %v773, 4
    %v988 = vmax.f32 %v773, %v987
    %v989 = vrot.slane %v988, 2
    %v990 = vmax.f32 %v988, %v989
    %v991 = vrot.slane %v990, 1
    %v992 = vmax.f32 %v990, %v991
    %v993 = vrot.slane %v774, 4
    %v994 = vmax.f32 %v774, %v993
    %v995 = vrot.slane %v994, 2
    %v996 = vmax.f32 %v994, %v995
    %v997 = vrot.slane %v996, 1
    %v998 = vmax.f32 %v996, %v997
    %v999 = vrot.slane %v775, 4
    %v1000 = vmax.f32 %v775, %v999
    %v1001 = vrot.slane %v1000, 2
    %v1002 = vmax.f32 %v1000, %v1001
    %v1003 = vrot.slane %v1002, 1
    %v1004 = vmax.f32 %v1002, %v1003
    %v1005 = vrot.slane %v776, 4
    %v1006 = vmax.f32 %v776, %v1005
    %v1007 = vrot.slane %v1006, 2
    %v1008 = vmax.f32 %v1006, %v1007
    %v1009 = vrot.slane %v1008, 1
    %v1010 = vmax.f32 %v1008, %v1009
    %v1011 = vrot.slane %v777, 4
    %v1012 = vmax.f32 %v777, %v1011
    %v1013 = vrot.slane %v1012, 2
    %v1014 = vmax.f32 %v1012, %v1013
    %v1015 = vrot.slane %v1014, 1
    %v1016 = vmax.f32 %v1014, %v1015
    %v1017 = vrot.slane %v778, 4
    %v1018 = vmax.f32 %v778, %v1017
    %v1019 = vrot.slane %v1018, 2
    %v1020 = vmax.f32 %v1018, %v1019
    %v1021 = vrot.slane %v1020, 1
    %v1022 = vmax.f32 %v1020, %v1021
    %v1023 = vrot.slane %v779, 4
    %v1024 = vmax.f32 %v779, %v1023
    %v1025 = vrot.slane %v1024, 2
    %v1026 = vmax.f32 %v1024, %v1025
    %v1027 = vrot.slane %v1026, 1
    %v1028 = vmax.f32 %v1026, %v1027
    %v1029 = vrot.slane %v780, 4
    %v1030 = vmax.f32 %v780, %v1029
    %v1031 = vrot.slane %v1030, 2
    %v1032 = vmax.f32 %v1030, %v1031
    %v1033 = vrot.slane %v1032, 1
    %v1034 = vmax.f32 %v1032, %v1033
    %v1035 = vrot.slane %v781, 4
    %v1036 = vmax.f32 %v781, %v1035
    %v1037 = vrot.slane %v1036, 2
    %v1038 = vmax.f32 %v1036, %v1037
    %v1039 = vrot.slane %v1038, 1
    %v1040 = vmax.f32 %v1038, %v1039
    %v1041 = vrot.slane %v782, 4
    %v1042 = vmax.f32 %v782, %v1041
    %v1043 = vrot.slane %v1042, 2
    %v1044 = vmax.f32 %v1042, %v1043
    %v1045 = vrot.slane %v1044, 1
    %v1046 = vmax.f32 %v1044, %v1045
    %v1047 = vrot.slane %v783, 4
    %v1048 = vmax.f32 %v783, %v1047
    %v1049 = vrot.slane %v1048, 2
    %v1050 = vmax.f32 %v1048, %v1049
    %v1051 = vrot.slane %v1050, 1
    %v1052 = vmax.f32 %v1050, %v1051
    %v1053 = vrot.slane %v784, 4
    %v1054 = vmax.f32 %v784, %v1053
    %v1055 = vrot.slane %v1054, 2
    %v1056 = vmax.f32 %v1054, %v1055
    %v1057 = vrot.slane %v1056, 1
    %v1058 = vmax.f32 %v1056, %v1057
    %v1059 = vrot.slane %v785, 4
    %v1060 = vmax.f32 %v785, %v1059
    %v1061 = vrot.slane %v1060, 2
    %v1062 = vmax.f32 %v1060, %v1061
    %v1063 = vrot.slane %v1062, 1
    %v1064 = vmax.f32 %v1062, %v1063
    %v1065 = vrot.slane %v786, 4
    %v1066 = vmax.f32 %v786, %v1065
    %v1067 = vrot.slane %v1066, 2
    %v1068 = vmax.f32 %v1066, %v1067
    %v1069 = vrot.slane %v1068, 1
    %v1070 = vmax.f32 %v1068, %v1069
    %v1071 = vrot.slane %v787, 4
    %v1072 = vmax.f32 %v787, %v1071
    %v1073 = vrot.slane %v1072, 2
    %v1074 = vmax.f32 %v1072, %v1073
    %v1075 = vrot.slane %v1074, 1
    %v1076 = vmax.f32 %v1074, %v1075
    %v1077 = vrot.slane %v788, 4
    %v1078 = vmax.f32 %v788, %v1077
    %v1079 = vrot.slane %v1078, 2
    %v1080 = vmax.f32 %v1078, %v1079
    %v1081 = vrot.slane %v1080, 1
    %v1082 = vmax.f32 %v1080, %v1081
    %v1083 = vrot.slane %v789, 4
    %v1084 = vmax.f32 %v789, %v1083
    %v1085 = vrot.slane %v1084, 2
    %v1086 = vmax.f32 %v1084, %v1085
    %v1087 = vrot.slane %v1086, 1
    %v1088 = vmax.f32 %v1086, %v1087
    %v1089 = vrot.slane %v790, 4
    %v1090 = vmax.f32 %v790, %v1089
    %v1091 = vrot.slane %v1090, 2
    %v1092 = vmax.f32 %v1090, %v1091
    %v1093 = vrot.slane %v1092, 1
    %v1094 = vmax.f32 %v1092, %v1093
    %v1095 = vrot.slane %v791, 4
    %v1096 = vmax.f32 %v791, %v1095
    %v1097 = vrot.slane %v1096, 2
    %v1098 = vmax.f32 %v1096, %v1097
    %v1099 = vrot.slane %v1098, 1
    %v1100 = vmax.f32 %v1098, %v1099
    %v1101 = vrot.slane %v792, 4
    %v1102 = vmax.f32 %v792, %v1101
    %v1103 = vrot.slane %v1102, 2
    %v1104 = vmax.f32 %v1102, %v1103
    %v1105 = vrot.slane %v1104, 1
    %v1106 = vmax.f32 %v1104, %v1105
    %v1107 = vrot.slane %v793, 4
    %v1108 = vmax.f32 %v793, %v1107
    %v1109 = vrot.slane %v1108, 2
    %v1110 = vmax.f32 %v1108, %v1109
    %v1111 = vrot.slane %v1110, 1
    %v1112 = vmax.f32 %v1110, %v1111
    %v1113 = vrot.slane %v794, 4
    %v1114 = vmax.f32 %v794, %v1113
    %v1115 = vrot.slane %v1114, 2
    %v1116 = vmax.f32 %v1114, %v1115
    %v1117 = vrot.slane %v1116, 1
    %v1118 = vmax.f32 %v1116, %v1117
    %v1119 = vrot.slane %v795, 4
    %v1120 = vmax.f32 %v795, %v1119
    %v1121 = vrot.slane %v1120, 2
    %v1122 = vmax.f32 %v1120, %v1121
    %v1123 = vrot.slane %v1122, 1
    %v1124 = vmax.f32 %v1122, %v1123
    %v1125 = vrot.slane %v796, 4
    %v1126 = vmax.f32 %v796, %v1125
    %v1127 = vrot.slane %v1126, 2
    %v1128 = vmax.f32 %v1126, %v1127
    %v1129 = vrot.slane %v1128, 1
    %v1130 = vmax.f32 %v1128, %v1129
    %v1131 = vrot.slane %v797, 4
    %v1132 = vmax.f32 %v797, %v1131
    %v1133 = vrot.slane %v1132, 2
    %v1134 = vmax.f32 %v1132, %v1133
    %v1135 = vrot.slane %v1134, 1
    %v1136 = vmax.f32 %v1134, %v1135
    %v1137 = vrot.slane %v798, 4
    %v1138 = vmax.f32 %v798, %v1137
    %v1139 = vrot.slane %v1138, 2
    %v1140 = vmax.f32 %v1138, %v1139
    %v1141 = vrot.slane %v1140, 1
    %v1142 = vmax.f32 %v1140, %v1141
    %v1143 = vrot.slane %v799, 4
    %v1144 = vmax.f32 %v799, %v1143
    %v1145 = vrot.slane %v1144, 2
    %v1146 = vmax.f32 %v1144, %v1145
    %v1147 = vrot.slane %v1146, 1
    %v1148 = vmax.f32 %v1146, %v1147
    %v1149 = vrot.slane %v800, 4
    %v1150 = vmax.f32 %v800, %v1149
    %v1151 = vrot.slane %v1150, 2
    %v1152 = vmax.f32 %v1150, %v1151
    %v1153 = vrot.slane %v1152, 1
    %v1154 = vmax.f32 %v1152, %v1153
    %v1155 = vrot.slane %v801, 4
    %v1156 = vmax.f32 %v801, %v1155
    %v1157 = vrot.slane %v1156, 2
    %v1158 = vmax.f32 %v1156, %v1157
    %v1159 = vrot.slane %v1158, 1
    %v1160 = vmax.f32 %v1158, %v1159
    %v1161 = vrot.slane %v802, 4
    %v1162 = vmax.f32 %v802, %v1161
    %v1163 = vrot.slane %v1162, 2
    %v1164 = vmax.f32 %v1162, %v1163
    %v1165 = vrot.slane %v1164, 1
    %v1166 = vmax.f32 %v1164, %v1165
    %v1167 = vrot.slane %v803, 4
    %v1168 = vmax.f32 %v803, %v1167
    %v1169 = vrot.slane %v1168, 2
    %v1170 = vmax.f32 %v1168, %v1169
    %v1171 = vrot.slane %v1170, 1
    %v1172 = vmax.f32 %v1170, %v1171
    %v1173 = vrot.slane %v804, 4
    %v1174 = vmax.f32 %v804, %v1173
    %v1175 = vrot.slane %v1174, 2
    %v1176 = vmax.f32 %v1174, %v1175
    %v1177 = vrot.slane %v1176, 1
    %v1178 = vmax.f32 %v1176, %v1177
    %v1179 = vrot.slane %v805, 4
    %v1180 = vmax.f32 %v805, %v1179
    %v1181 = vrot.slane %v1180, 2
    %v1182 = vmax.f32 %v1180, %v1181
    %v1183 = vrot.slane %v1182, 1
    %v1184 = vmax.f32 %v1182, %v1183
    %v1185 = vrot.slane %v806, 4
    %v1186 = vmax.f32 %v806, %v1185
    %v1187 = vrot.slane %v1186, 2
    %v1188 = vmax.f32 %v1186, %v1187
    %v1189 = vrot.slane %v1188, 1
    %v1190 = vmax.f32 %v1188, %v1189
    %vm1255 = vcmask 1041409
    %v1256 = vsel %vm1255, %v818, %v812
    %vm1257 = vcmask 1042434
    %v1258 = vsel %vm1257, %v824, %v1256
    %vm1259 = vcmask 1043459
    %v1260 = vsel %vm1259, %v830, %v1258
    %vm1261 = vcmask 1044484
    %v1262 = vsel %vm1261, %v836, %v1260
    %vm1263 = vcmask 1045509
    %v1264 = vsel %vm1263, %v842, %v1262
    %vm1265 = vcmask 1046534
    %v1266 = vsel %vm1265, %v848, %v1264
    %vm1267 = vcmask 1047559
    %v1268 = vsel %vm1267, %v854, %v1266
    %v1269 = vsel %vm1255, %v866, %v860
    %v1270 = vsel %vm1257, %v872, %v1269
    %v1271 = vsel %vm1259, %v878, %v1270
    %v1272 = vsel %vm1261, %v884, %v1271
    %v1273 = vsel %vm1263, %v890, %v1272
    %v1274 = vsel %vm1265, %v896, %v1273
    %v1275 = vsel %vm1267, %v902, %v1274
    %v1276 = vsel %vm1255, %v914, %v908
    %v1277 = vsel %vm1257, %v920, %v1276
    %v1278 = vsel %vm1259, %v926, %v1277
    %v1279 = vsel %vm1261, %v932, %v1278
    %v1280 = vsel %vm1263, %v938, %v1279
    %v1281 = vsel %vm1265, %v944, %v1280
    %v1282 = vsel %vm1267, %v950, %v1281
    %v1283 = vsel %vm1255, %v962, %v956
    %v1284 = vsel %vm1257, %v968, %v1283
    %v1285 = vsel %vm1259, %v974, %v1284
    %v1286 = vsel %vm1261, %v980, %v1285
    %v1287 = vsel %vm1263, %v986, %v1286
    %v1288 = vsel %vm1265, %v992, %v1287
    %v1289 = vsel %vm1267, %v998, %v1288
    %v1290 = vsel %vm1255, %v1010, %v1004
    %v1291 = vsel %vm1257, %v1016, %v1290
    %v1292 = vsel %vm1259, %v1022, %v1291
    %v1293 = vsel %vm1261, %v1028, %v1292
    %v1294 = vsel %vm1263, %v1034, %v1293
    %v1295 = vsel %vm1265, %v1040, %v1294
    %v1296 = vsel %vm1267, %v1046, %v1295
    %v1297 = vsel %vm1255, %v1058, %v1052
    %v1298 = vsel %vm1257, %v1064, %v1297
    %v1299 = vsel %vm1259, %v1070, %v1298
    %v1300 = vsel %vm1261, %v1076, %v1299
    %v1301 = vsel %vm1263, %v1082, %v1300
    %v1302 = vsel %vm1265, %v1088, %v1301
    %v1303 = vsel %vm1267, %v1094, %v1302
    %v1304 = vsel %vm1255, %v1106, %v1100
    %v1305 = vsel %vm1257, %v1112, %v1304
    %v1306 = vsel %vm1259, %v1118, %v1305
    %v1307 = vsel %vm1261, %v1124, %v1306
    %v1308 = vsel %vm1263, %v1130, %v1307
    %v1309 = vsel %vm1265, %v1136, %v1308
    %v1310 = vsel %vm1267, %v1142, %v1309
    %v1311 = vsel %vm1255, %v1154, %v1148
    %v1312 = vsel %vm1257, %v1160, %v1311
    %v1313 = vsel %vm1259, %v1166, %v1312
    %v1314 = vsel %vm1261, %v1172, %v1313
    %v1315 = vsel %vm1263, %v1178, %v1314
    %v1316 = vsel %vm1265, %v1184, %v1315
    %v1317 = vsel %vm1267, %v1190, %v1316
    %1326 = vst [vmem:[#allocation2] sm:$0xff] %v1268
    %1327 = vst [vmem:[#allocation2 + $0x8] sm:$0xff] %v1275
    %1328 = vst [vmem:[#allocation2 + $0x10] sm:$0xff] %v1282
    %1329 = vst [vmem:[#allocation2 + $0x18] sm:$0xff] %v1289
    %1330 = vst [vmem:[#allocation2 + $0x20] sm:$0xff] %v1296
    %1331 = vst [vmem:[#allocation2 + $0x28] sm:$0xff] %v1303
    %1332 = vst [vmem:[#allocation2 + $0x30] sm:$0xff] %v1310
    %1333 = vst [vmem:[#allocation2 + $0x38] sm:$0xff] %v1317
    // Predicated region
    $region18: #{piecewise_cnn_forward.1} parent=1 // pred_check
      _
    $region19: #{piecewise_cnn_forward.1} parent=1 // pred_check_branch
      %1335 = sbr.rel (0) target = $region21
    $region20: #{piecewise_cnn_forward.1} parent=1 // pred_region
      %s1337 = ssub.s32 1024, 1024
      %1338 = vsyncadd [#allocation3], %s1337
      %s1339 = sshll.u32 [#allocation2], 4
      %s1340 = int_to_ptr.vmem [resolvable:$true] %s1339
      %1345 = dma.vmem_to_hbm [thread:$0]  %s1340, 1024, %s4, [#allocation3], 128, 128, 8
    $region21: #{piecewise_cnn_forward.1} parent=1 // pred_fallthru
      _
    // Predicated region
    $region22: #{piecewise_cnn_forward.1} parent=1 // pred_check
      _
    $region23: #{piecewise_cnn_forward.1} parent=1 // pred_check_branch
      %1347 = sbr.rel (0) target = $region25
    $region24: #{piecewise_cnn_forward.1} parent=1 // pred_region
      %1348 = dma.done [#allocation3], 1024
    $region25: #{piecewise_cnn_forward.1} parent=1 // pred_fallthru
      _
    %1349 = vsyncpa [#allocation3], 1

</llo_original>
